<compile_context>
chip_gen: v6e
topology: v6e:2x2x1
jax: 0.10.0
libtpu: 0.0.40
codegen_flags: <defaults>
</compile_context>

<pallas_src>
import jax
import jax.numpy as jnp
from jax.experimental import pallas as pl
from jax.experimental.pallas import tpu as pltpu

IN_DIM = 4              # CartPole observation size
HID = 128               # hidden width
N_ACTIONS = 2
HEAD_PAD = 128          # fused head output lanes (2 logits + 1 value + dead)
VALUE_LANE = N_ACTIONS  # lane 2 carries the state value
NEG_BIG = -1e30         # finite "-inf" for masked softmax lanes
TB_MAX = 4096           # max rows per grid step (v5e/v6e: fewer, bigger steps)
SPLIT_THRESHOLD = 256   # above this, force >=2 grid steps so v7x uses both TCs


def _cdiv(a, b):
    return -(-a // b)


def _round_up(n, m):
    return ((n + m - 1) // m) * m


def _choose_tiling(B):
    """Balanced tiling: <=7 padded rows; >=2 tiles for medium/large batches."""
    n_tiles = _cdiv(B, TB_MAX)
    if B > SPLIT_THRESHOLD:
        # >=2 steps lets ("parallel",) shard the grid over both v7x
        # TensorCores; on single-TC v5e/v6e the extra step costs ~0.35 us.
        n_tiles = max(2, n_tiles)
    tb = _round_up(_cdiv(B, n_tiles), 8)     # f32 sublane multiple
    return tb, n_tiles * tb, n_tiles


def policy_kernel(x_ref, w1_ref, b1_ref, wh_ref, bh_ref, vsel_ref, out_ref):
    x = x_ref[...]                     # (TB, 4)
    w1 = w1_ref[...]                   # (4, 128)

    # Hidden layer on the VPU: 4 broadcast FMAs against the rows of w1.
    # (torch's ReLU(ReLU(.)) collapses to a single ReLU.)
    h = x[:, 0:1] * w1[0:1, :] + b1_ref[...]
    for k in range(1, IN_DIM):
        h = h + x[:, k:k + 1] * w1[k:k + 1, :]
    h = jnp.maximum(h, 0.0)            # (TB, 128)

    # Fused heads on the MXU: lanes 0..1 = logits, lane 2 = value, lanes >=3
    # carry a -1e30 bias (zero weight columns) so they vanish in the softmax.
    z = jnp.dot(h, wh_ref[...], preferred_element_type=jnp.float32) + bh_ref[...]

    vsel = vsel_ref[...]               # (1, 128) one-hot on the value lane
    logits = z + vsel * NEG_BIG        # additionally mask the value lane
    m = jnp.max(logits, axis=-1, keepdims=True)
    e = jnp.exp(logits - m)            # masked lanes underflow to exactly 0
    probs = e / jnp.sum(e, axis=-1, keepdims=True)   # exact divide

    # Raw value into lane 2, softmax probabilities elsewhere (dead lanes -> 0).
    out_ref[...] = jnp.where(vsel > 0.0, z, probs)


def init_params(key):
    """Deterministic synthetic parameters (torch Linear shapes, pre-transposed)."""
    k1, k2, k3, k4, k5, k6 = jax.random.split(key, 6)
    w1 = jax.random.normal(k1, (IN_DIM, HID), jnp.float32) * 0.1    # affine1
    b1 = jax.random.normal(k2, (HID,), jnp.float32) * 0.1
    wa = jax.random.normal(k3, (HID, N_ACTIONS), jnp.float32) * 0.1  # action_head
    ba = jax.random.normal(k4, (N_ACTIONS,), jnp.float32) * 0.1
    wv = jax.random.normal(k5, (HID, 1), jnp.float32) * 0.1          # value_head
    bv = jax.random.normal(k6, (1,), jnp.float32) * 0.1
    return w1, b1, wa, ba, wv, bv


def fuse_params(params):
    """One-time weight prep: fuse both heads; bake the dead-lane mask into bh."""
    w1, b1, wa, ba, wv, bv = params
    b1_p = b1.reshape(1, HID)
    wh = (jnp.zeros((HID, HEAD_PAD), jnp.float32)
          .at[:, :N_ACTIONS].set(wa)
          .at[:, VALUE_LANE:VALUE_LANE + 1].set(wv))
    bh = (jnp.full((1, HEAD_PAD), NEG_BIG, jnp.float32)   # lanes >= 3 masked
          .at[0, :N_ACTIONS].set(ba)
          .at[0, VALUE_LANE].set(bv[0]))
    vsel = (jnp.arange(HEAD_PAD) == VALUE_LANE).astype(jnp.float32)
    vsel = vsel.reshape(1, HEAD_PAD)
    return w1, b1_p, wh, bh, vsel


@jax.jit
def policy_forward(x, fused):
    w1, b1, wh, bh, vsel = fused
    B = x.shape[0]
    tb, b_pad, n_tiles = _choose_tiling(B)
    if b_pad != B:                                   # row pad only
        x = jnp.pad(x, ((0, b_pad - B), (0, 0)))

    flops = 2 * b_pad * (IN_DIM * HID + HID * HEAD_PAD)
    transcendentals = b_pad * HEAD_PAD               # exp per output lane
    weight_bytes = 4 * (IN_DIM * HID + HID + HID * HEAD_PAD + 2 * HEAD_PAD)
    bytes_accessed = 4 * b_pad * (IN_DIM + HEAD_PAD) + weight_bytes

    def const_spec(shape):
        # Constant index_map -> block stays VMEM-resident across grid steps.
        return pl.BlockSpec(shape, lambda i: (0, 0))

    out = pl.pallas_call(
        policy_kernel,
        out_shape=jax.ShapeDtypeStruct((b_pad, HEAD_PAD), jnp.float32),
        grid_spec=pltpu.PrefetchScalarGridSpec(
            num_scalar_prefetch=0,
            grid=(n_tiles,),
            in_specs=[
                pl.BlockSpec((tb, IN_DIM), lambda i: (i, 0)),   # x tile
                const_spec((IN_DIM, HID)),                      # w1
                const_spec((1, HID)),                           # b1
                const_spec((HID, HEAD_PAD)),                    # fused head W
                const_spec((1, HEAD_PAD)),                      # fused head b (+mask)
                const_spec((1, HEAD_PAD)),                      # value-lane selector
            ],
            out_specs=pl.BlockSpec((tb, HEAD_PAD), lambda i: (i, 0)),
        ),
        compiler_params=pltpu.CompilerParams(
            dimension_semantics=("parallel",)),      # shards grid over 2 TCs on v7x
        cost_estimate=pl.CostEstimate(
            flops=flops,
            transcendentals=transcendentals,
            bytes_accessed=bytes_accessed),
    )(x, w1, b1, wh, bh, vsel)

    probs = out[:B, :N_ACTIONS]
    values = out[:B, VALUE_LANE:VALUE_LANE + 1]
    return probs, values


def reference_forward(x, params):
    w1, b1, wa, ba, wv, bv = params
    h = jnp.maximum(x @ w1 + b1, 0.0)
    probs = jax.nn.softmax(h @ wa + ba, axis=-1)
    values = h @ wv + bv
    return probs, values


if __name__ == "__main__":
    key = jax.random.PRNGKey(0)
    kx, kp = jax.random.split(key)

    params = init_params(kp)
    fused = fuse_params(params)

    # batch=8:   single grid step.
    # batch=520: balanced 2-way split -> two (264, .) tiles (8 padded rows).
    # batch=2560: forced >=2 tiles path for large batches (two 1280-row tiles).
    for batch in (8, 520, 2560):
        x = jax.random.normal(jax.random.fold_in(kx, batch),
                              (batch, IN_DIM), jnp.float32)
        probs, values = policy_forward(x, fused)
        jax.block_until_ready((probs, values))

        ref_probs, ref_values = reference_forward(x, params)
        assert probs.shape == (batch, N_ACTIONS)
        assert values.shape == (batch, 1)
        assert jnp.allclose(probs, ref_probs, atol=1e-4, rtol=1e-4)
        assert jnp.allclose(jnp.sum(probs, axis=-1), 1.0, atol=1e-5)
        assert jnp.allclose(values, ref_values, atol=1e-5, rtol=1e-4)

    print("KERNEL_OK")
</pallas_src>

<mosaic_0001>
module attributes {stable_mosaic.version = 11 : i64} {
  func.func @policy_kernel(%arg0: i32, %arg1: memref<8x4xf32, #tpu.memory_space<vmem>>, %arg2: memref<4x128xf32, #tpu.memory_space<vmem>>, %arg3: memref<1x128xf32, #tpu.memory_space<vmem>>, %arg4: memref<128x128xf32, #tpu.memory_space<vmem>>, %arg5: memref<1x128xf32, #tpu.memory_space<vmem>>, %arg6: memref<1x128xf32, #tpu.memory_space<vmem>>, %arg7: memref<8x128xf32, #tpu.memory_space<vmem>>) attributes {dimension_semantics = [#tpu.dimension_semantics<parallel>], iteration_bounds = array<i64: 1>, scalar_prefetch = 0 : i64, scratch_operands = 0 : i64, tpu.core_type = #tpu.core_type<tc>, window_params = [{transform_indices = @transform_0, window_bounds = array<i64: 8, 4>}, {pipeline_mode = #tpu.pipeline_mode<synchronous>, transform_indices = @transform_1, window_bounds = array<i64: 4, 128>}, {pipeline_mode = #tpu.pipeline_mode<synchronous>, transform_indices = @transform_2, window_bounds = array<i64: 1, 128>}, {pipeline_mode = #tpu.pipeline_mode<synchronous>, transform_indices = @transform_3, window_bounds = array<i64: 128, 128>}, {pipeline_mode = #tpu.pipeline_mode<synchronous>, transform_indices = @transform_4, window_bounds = array<i64: 1, 128>}, {pipeline_mode = #tpu.pipeline_mode<synchronous>, transform_indices = @transform_5, window_bounds = array<i64: 1, 128>}, {transform_indices = @transform_6, window_bounds = array<i64: 8, 128>}]} {
    %c0 = arith.constant 0 : index
    %c0_0 = arith.constant 0 : index
    %0 = vector.load %arg1[%c0, %c0_0] : memref<8x4xf32, #tpu.memory_space<vmem>>, vector<8x4xf32>
    %c0_1 = arith.constant 0 : index
    %c0_2 = arith.constant 0 : index
    %1 = vector.load %arg2[%c0_1, %c0_2] : memref<4x128xf32, #tpu.memory_space<vmem>>, vector<4x128xf32>
    %2 = vector.extract_strided_slice %0 {offsets = [0, 0], sizes = [8, 1], strides = [1, 1]} : vector<8x4xf32> to vector<8x1xf32>
    %3 = vector.extract_strided_slice %1 {offsets = [0, 0], sizes = [1, 128], strides = [1, 1]} : vector<4x128xf32> to vector<1x128xf32>
    %4 = vector.broadcast %2 : vector<8x1xf32> to vector<8x128xf32>
    %5 = vector.broadcast %3 : vector<1x128xf32> to vector<8x128xf32>
    %6 = arith.mulf %4, %5 : vector<8x128xf32>
    %c0_3 = arith.constant 0 : index
    %c0_4 = arith.constant 0 : index
    %7 = vector.load %arg3[%c0_3, %c0_4] : memref<1x128xf32, #tpu.memory_space<vmem>>, vector<1x128xf32>
    %8 = vector.broadcast %7 : vector<1x128xf32> to vector<8x128xf32>
    %9 = arith.addf %6, %8 : vector<8x128xf32>
    %10 = vector.extract_strided_slice %0 {offsets = [0, 1], sizes = [8, 1], strides = [1, 1]} : vector<8x4xf32> to vector<8x1xf32>
    %11 = vector.extract_strided_slice %1 {offsets = [1, 0], sizes = [1, 128], strides = [1, 1]} : vector<4x128xf32> to vector<1x128xf32>
    %12 = vector.broadcast %10 : vector<8x1xf32> to vector<8x128xf32>
    %13 = vector.broadcast %11 : vector<1x128xf32> to vector<8x128xf32>
    %14 = arith.mulf %12, %13 : vector<8x128xf32>
    %15 = arith.addf %9, %14 : vector<8x128xf32>
    %16 = vector.extract_strided_slice %0 {offsets = [0, 2], sizes = [8, 1], strides = [1, 1]} : vector<8x4xf32> to vector<8x1xf32>
    %17 = vector.extract_strided_slice %1 {offsets = [2, 0], sizes = [1, 128], strides = [1, 1]} : vector<4x128xf32> to vector<1x128xf32>
    %18 = vector.broadcast %16 : vector<8x1xf32> to vector<8x128xf32>
    %19 = vector.broadcast %17 : vector<1x128xf32> to vector<8x128xf32>
    %20 = arith.mulf %18, %19 : vector<8x128xf32>
    %21 = arith.addf %15, %20 : vector<8x128xf32>
    %22 = vector.extract_strided_slice %0 {offsets = [0, 3], sizes = [8, 1], strides = [1, 1]} : vector<8x4xf32> to vector<8x1xf32>
    %23 = vector.extract_strided_slice %1 {offsets = [3, 0], sizes = [1, 128], strides = [1, 1]} : vector<4x128xf32> to vector<1x128xf32>
    %24 = vector.broadcast %22 : vector<8x1xf32> to vector<8x128xf32>
    %25 = vector.broadcast %23 : vector<1x128xf32> to vector<8x128xf32>
    %26 = arith.mulf %24, %25 : vector<8x128xf32>
    %27 = arith.addf %21, %26 : vector<8x128xf32>
    %cst = arith.constant 0.000000e+00 : f32
    %28 = vector.broadcast %cst : f32 to vector<8x128xf32>
    %29 = arith.maximumf %27, %28 : vector<8x128xf32>
    %c0_5 = arith.constant 0 : index
    %c0_6 = arith.constant 0 : index
    %30 = vector.load %arg4[%c0_5, %c0_6] : memref<128x128xf32, #tpu.memory_space<vmem>>, vector<128x128xf32>
    %cst_7 = arith.constant dense<0.000000e+00> : vector<8x128xf32>
    %31 = tpu.matmul %29, %30, %cst_7 {dimension_numbers = #tpu.dot_dimension_numbers<[1], [0], [0], [1], [0, 0, 1, 1], [], []>} : vector<8x128xf32>, vector<128x128xf32>, vector<8x128xf32> -> vector<8x128xf32>
    %c0_8 = arith.constant 0 : index
    %c0_9 = arith.constant 0 : index
    %32 = vector.load %arg5[%c0_8, %c0_9] : memref<1x128xf32, #tpu.memory_space<vmem>>, vector<1x128xf32>
    %33 = vector.broadcast %32 : vector<1x128xf32> to vector<8x128xf32>
    %34 = arith.addf %31, %33 : vector<8x128xf32>
    %c0_10 = arith.constant 0 : index
    %c0_11 = arith.constant 0 : index
    %35 = vector.load %arg6[%c0_10, %c0_11] : memref<1x128xf32, #tpu.memory_space<vmem>>, vector<1x128xf32>
    %cst_12 = arith.constant -1.000000e+30 : f32
    %36 = vector.broadcast %cst_12 : f32 to vector<1x128xf32>
    %37 = arith.mulf %35, %36 : vector<1x128xf32>
    %38 = vector.broadcast %37 : vector<1x128xf32> to vector<8x128xf32>
    %39 = arith.addf %34, %38 : vector<8x128xf32>
    %cst_13 = arith.constant dense<0xFF800000> : vector<8xf32>
    %40 = vector.multi_reduction <maximumf>, %39, %cst_13 [1] : vector<8x128xf32> to vector<8xf32>
    %41 = vector.shape_cast %40 : vector<8xf32> to vector<8x1xf32>
    %42 = vector.broadcast %41 : vector<8x1xf32> to vector<8x128xf32>
    %43 = arith.subf %39, %42 : vector<8x128xf32>
    %44 = math.exp %43 : vector<8x128xf32>
    %cst_14 = arith.constant dense<0.000000e+00> : vector<8xf32>
    %45 = vector.multi_reduction <add>, %44, %cst_14 [1] : vector<8x128xf32> to vector<8xf32>
    %46 = vector.shape_cast %45 : vector<8xf32> to vector<8x1xf32>
    %47 = vector.broadcast %46 : vector<8x1xf32> to vector<8x128xf32>
    %48 = arith.divf %44, %47 : vector<8x128xf32>
    %cst_15 = arith.constant 0.000000e+00 : f32
    %49 = vector.broadcast %cst_15 : f32 to vector<1x128xf32>
    %50 = arith.cmpf ogt, %35, %49 : vector<1x128xf32>
    %51 = vector.shape_cast %50 : vector<1x128xi1> to vector<1x128xi1>
    %52 = vector.broadcast %51 : vector<1x128xi1> to vector<8x128xi1>
    %53 = arith.select %52, %34, %48 : vector<8x128xi1>, vector<8x128xf32>
    %c0_16 = arith.constant 0 : index
    %c0_17 = arith.constant 0 : index
    %54 = vector.load %arg7[%c0_16, %c0_17] : memref<8x128xf32, #tpu.memory_space<vmem>>, vector<8x128xf32>
    tpu.vector_store %arg7[%c0_16, %c0_17], %53 {strides = array<i32>} : memref<8x128xf32, #tpu.memory_space<vmem>>, vector<8x128xf32>,
    return
  }
  func.func @transform_0(%arg0: i32) -> (i32, i32) {
    %c0_i32 = arith.constant 0 : i32
    %c0_i32_0 = arith.constant 0 : i32
    return %arg0, %c0_i32 : i32, i32
  }
  func.func @transform_1(%arg0: i32) -> (i32, i32) {
    %c0_i32 = arith.constant 0 : i32
    %c0_i32_0 = arith.constant 0 : i32
    %c0_i32_1 = arith.constant 0 : i32
    return %c0_i32, %c0_i32_0 : i32, i32
  }
  func.func @transform_2(%arg0: i32) -> (i32, i32) {
    %c0_i32 = arith.constant 0 : i32
    %c0_i32_0 = arith.constant 0 : i32
    %c0_i32_1 = arith.constant 0 : i32
    return %c0_i32, %c0_i32_0 : i32, i32
  }
  func.func @transform_3(%arg0: i32) -> (i32, i32) {
    %c0_i32 = arith.constant 0 : i32
    %c0_i32_0 = arith.constant 0 : i32
    %c0_i32_1 = arith.constant 0 : i32
    return %c0_i32, %c0_i32_0 : i32, i32
  }
  func.func @transform_4(%arg0: i32) -> (i32, i32) {
    %c0_i32 = arith.constant 0 : i32
    %c0_i32_0 = arith.constant 0 : i32
    %c0_i32_1 = arith.constant 0 : i32
    return %c0_i32, %c0_i32_0 : i32, i32
  }
  func.func @transform_5(%arg0: i32) -> (i32, i32) {
    %c0_i32 = arith.constant 0 : i32
    %c0_i32_0 = arith.constant 0 : i32
    %c0_i32_1 = arith.constant 0 : i32
    return %c0_i32, %c0_i32_0 : i32, i32
  }
  func.func @transform_6(%arg0: i32) -> (i32, i32) {
    %c0_i32 = arith.constant 0 : i32
    %c0_i32_0 = arith.constant 0 : i32
    return %arg0, %c0_i32 : i32, i32
  }
}

</mosaic_0001>

<llo_original>
// kernel: policy_forward.1
$region0: #{policy_forward.1}
  #allocation0 [shape = 'u32[]', space=smem, size = 0x4, offset = 0x4, fixed_abs, tag = 'smem constant byte address 0x4 - core index']
  #allocation1 [shape = 'u32[144,128]{1,0:T(1,128)}', space=vmem, size = 0x12000, scoped, tag = 'internal scratch']
  %s0 = inlined_call_operand.vmem [shape: f32[8,4], index: 0, kind: input, shape index: {}]
  %s1 = inlined_call_operand.vmem [shape: f32[4,128], index: 1, kind: input, shape index: {}]
  %s2 = inlined_call_operand.vmem [shape: f32[1,128], index: 2, kind: input, shape index: {}]
  %s3 = inlined_call_operand.hbm [shape: f32[128,128], index: 3, kind: input, shape index: {}]
  %s4 = inlined_call_operand.vmem [shape: f32[1,128], index: 4, kind: input, shape index: {}]
  %s5 = inlined_call_operand.vmem [shape: f32[1,128], index: 5, kind: input, shape index: {}]
  %s6 = inlined_call_operand.vmem [shape: f32[8,128], index: 6, kind: output, shape index: {}]
  %s7 = sld [smem:[#allocation0]]
  $region38: #{policy_forward.1} parent=0
    _
  %s9 = ssub.s32 1, %s7
  %s10 = scalar_select 0, %s9, %s7
  $region1: #{policy_forward.1} parent=0
    #allocation2 [shape = 'u8[65536]{0}', space=vmem, size = 0x10000, scoped, tag = 'input window, operand 3, single buffered']
    #allocation3 [shape = 's32[1]{0}', space=sflag, size = 0x4, scoped, tag = 'scoped memory for policy_forward.1']
    %11 = vsyncpa [#allocation3], 0
    // Predicated region
    $region2: #{policy_forward.1} parent=1 // pred_check
      _
    $region3: #{policy_forward.1} parent=1 // pred_check_branch
      %13 = sbr.rel (0) target = $region5
    $region4: #{policy_forward.1} parent=1 // pred_region
      _
    $region5: #{policy_forward.1} parent=1 // pred_fallthru
      _
    // Predicated region
    $region6: #{policy_forward.1} parent=1 // pred_check
      _
    $region7: #{policy_forward.1} parent=1 // pred_check_branch
      %15 = sbr.rel (0) target = $region9
    $region8: #{policy_forward.1} parent=1 // pred_region
      _
    $region9: #{policy_forward.1} parent=1 // pred_fallthru
      _
    // Predicated region
    $region10: #{policy_forward.1} parent=1 // pred_check
      _
    $region11: #{policy_forward.1} parent=1 // pred_check_branch
      %17 = sbr.rel (0) target = $region13
    $region12: #{policy_forward.1} parent=1 // pred_region
      _
    $region13: #{policy_forward.1} parent=1 // pred_fallthru
      _
    // Predicated region
    $region14: #{policy_forward.1} parent=1 // pred_check
      _
    $region15: #{policy_forward.1} parent=1 // pred_check_branch
      %19 = sbr.rel (0) target = $region17
    $region16: #{policy_forward.1} parent=1 // pred_region
      %s21 = ssub.s32 2048, 2048
      %22 = vsyncadd [#allocation3], %s21
      %s23 = sshll.u32 [#allocation2], 4
      %s24 = int_to_ptr.vmem [resolvable:$true] %s23
      %29 = dma.hbm_to_vmem [thread:$0]  %s3, 2048, %s24, [#allocation3], 128, 128, 8
    $region17: #{policy_forward.1} parent=1 // pred_fallthru
      _
    // Predicated region
    $region18: #{policy_forward.1} parent=1 // pred_check
      _
    $region19: #{policy_forward.1} parent=1 // pred_check_branch
      %31 = sbr.rel (0) target = $region21
    $region20: #{policy_forward.1} parent=1 // pred_region
      _
    $region21: #{policy_forward.1} parent=1 // pred_fallthru
      _
    // Predicated region
    $region22: #{policy_forward.1} parent=1 // pred_check
      _
    $region23: #{policy_forward.1} parent=1 // pred_check_branch
      %33 = sbr.rel (0) target = $region25
    $region24: #{policy_forward.1} parent=1 // pred_region
      _
    $region25: #{policy_forward.1} parent=1 // pred_fallthru
      _
    // Predicated region
    $region26: #{policy_forward.1} parent=1 // pred_check
      _
    $region27: #{policy_forward.1} parent=1 // pred_check_branch
      %35 = sbr.rel (0) target = $region29
    $region28: #{policy_forward.1} parent=1 // pred_region
      %36 = dma.done [#allocation3], 2048
    $region29: #{policy_forward.1} parent=1 // pred_fallthru
      _
    %v37 = vld [vmem:[%s0] sm:$0xff]
    %v38 = vld [vmem:[%s1] sm:$0xf]
    %40 = vset.pattern.permute.xlu0 0
    %41 = vperm.xlu0 %40, %v37
    %v42 = vpop.permute.xlu0 %41
    %v44 = vlaneseq
    %v45 = vshrl.u32 %v44, 7
    %v46 = vsub.s32 0, %v45
    %v47 = vrot.slane %v38, %v46
    %v48 = vmul.f32 %v42, %v47
    %v49 = vld [vmem:[%s2] sm:$0x1]
    %v51 = vlaneseq
    %v52 = vshrl.u32 %v51, 7
    %v53 = vsub.s32 0, %v52
    %v54 = vrot.slane %v49, %v53
    %v56 = vadd.f32 %v48, %v54
    %57 = vset.pattern.permute.xlu0 1
    %58 = vperm.xlu0 %57, %v37
    %v59 = vpop.permute.xlu0 %58
    %v61 = vlaneseq
    %v62 = vshrl.u32 %v61, 7
    %v63 = vsub.s32 1, %v62
    %v64 = vrot.slane %v38, %v63
    %v65 = vmul.f32 %v59, %v64
    %v66 = vadd.f32 %v56, %v65
    %67 = vset.pattern.permute.xlu0 2
    %68 = vperm.xlu0 %67, %v37
    %v69 = vpop.permute.xlu0 %68
    %v71 = vlaneseq
    %v72 = vshrl.u32 %v71, 7
    %v73 = vsub.s32 2, %v72
    %v74 = vrot.slane %v38, %v73
    %v75 = vmul.f32 %v69, %v74
    %v76 = vadd.f32 %v66, %v75
    %77 = vset.pattern.permute.xlu0 3
    %78 = vperm.xlu0 %77, %v37
    %v79 = vpop.permute.xlu0 %78
    %v81 = vlaneseq
    %v82 = vshrl.u32 %v81, 7
    %v83 = vsub.s32 3, %v82
    %v84 = vrot.slane %v38, %v83
    %v85 = vmul.f32 %v79, %v84
    %v86 = vadd.f32 %v76, %v85
    %v87 = vmax.f32 %v86, 0.0
    %v88 = vld [vmem:[#allocation2] sm:$0xff]
    %v89 = vld [vmem:[#allocation2 + $0x8] sm:$0xff]
    %v90 = vld [vmem:[#allocation2 + $0x10] sm:$0xff]
    %v91 = vld [vmem:[#allocation2 + $0x18] sm:$0xff]
    %v92 = vld [vmem:[#allocation2 + $0x20] sm:$0xff]
    %v93 = vld [vmem:[#allocation2 + $0x28] sm:$0xff]
    %v94 = vld [vmem:[#allocation2 + $0x30] sm:$0xff]
    %v95 = vld [vmem:[#allocation2 + $0x38] sm:$0xff]
    %v96 = vld [vmem:[#allocation2 + $0x40] sm:$0xff]
    %v97 = vld [vmem:[#allocation2 + $0x48] sm:$0xff]
    %v98 = vld [vmem:[#allocation2 + $0x50] sm:$0xff]
    %v99 = vld [vmem:[#allocation2 + $0x58] sm:$0xff]
    %v100 = vld [vmem:[#allocation2 + $0x60] sm:$0xff]
    %v101 = vld [vmem:[#allocation2 + $0x68] sm:$0xff]
    %v102 = vld [vmem:[#allocation2 + $0x70] sm:$0xff]
    %v103 = vld [vmem:[#allocation2 + $0x78] sm:$0xff]
    %v104 = vld [vmem:[%s4] sm:$0x1]
    %v106 = vlaneseq
    %v107 = vshrl.u32 %v106, 7
    %v108 = vsub.s32 0, %v107
    %v109 = vrot.slane %v104, %v108
    %111 = vmatprep.subr.mxu0 0.0
    %112 = vmatpush1.msra.mxu0 %v103
    %113 = vmatprep.subr.mxu0 0.0
    %114 = vmatpush1.msra.mxu0 %v102
    %115 = vmatprep.subr.mxu0 0.0
    %116 = vmatpush1.msra.mxu0 %v101
    %117 = vmatprep.subr.mxu0 0.0
    %118 = vmatpush1.msra.mxu0 %v100
    %119 = vmatprep.subr.mxu0 0.0
    %120 = vmatpush1.msra.mxu0 %v99
    %121 = vmatprep.subr.mxu0 0.0
    %122 = vmatpush1.msra.mxu0 %v98
    %123 = vmatprep.subr.mxu0 0.0
    %124 = vmatpush1.msra.mxu0 %v97
    %125 = vmatprep.subr.mxu0 0.0
    %126 = vmatpush1.msra.mxu0 %v96
    %127 = vmatprep.subr.mxu0 0.0
    %128 = vmatpush1.msra.mxu0 %v95
    %129 = vmatprep.subr.mxu0 0.0
    %130 = vmatpush1.msra.mxu0 %v94
    %131 = vmatprep.subr.mxu0 0.0
    %132 = vmatpush1.msra.mxu0 %v93
    %133 = vmatprep.subr.mxu0 0.0
    %134 = vmatpush1.msra.mxu0 %v92
    %135 = vmatprep.subr.mxu0 0.0
    %136 = vmatpush1.msra.mxu0 %v91
    %137 = vmatprep.subr.mxu0 0.0
    %138 = vmatpush1.msra.mxu0 %v90
    %139 = vmatprep.subr.mxu0 0.0
    %140 = vmatpush1.msra.mxu0 %v89
    %141 = vmatprep.subr.mxu0 0.0
    %142 = vmatpush1.msra.mxu0 %v88
    %143 = vmatprep.subr.mxu0 0.0
    %144 = vmatpush2.msra.mxu0 0.0
    %145 = vmatprep.subr.mxu0 0.0
    %146 = vmatpush2.msra.mxu0 0.0
    %147 = vmatprep.subr.mxu0 0.0
    %148 = vmatpush2.msra.mxu0 0.0
    %149 = vmatprep.subr.mxu0 0.0
    %150 = vmatpush2.msra.mxu0 0.0
    %151 = vmatprep.subr.mxu0 0.0
    %152 = vmatpush2.msra.mxu0 0.0
    %153 = vmatprep.subr.mxu0 0.0
    %154 = vmatpush2.msra.mxu0 0.0
    %155 = vmatprep.subr.mxu0 0.0
    %156 = vmatpush2.msra.mxu0 0.0
    %157 = vmatprep.subr.mxu0 0.0
    %158 = vmatpush2.msra.mxu0 0.0
    %159 = vmatprep.subr.mxu0 0.0
    %160 = vmatpush2.msra.mxu0 0.0
    %161 = vmatprep.subr.mxu0 0.0
    %162 = vmatpush2.msra.mxu0 0.0
    %163 = vmatprep.subr.mxu0 0.0
    %164 = vmatpush2.msra.mxu0 0.0
    %165 = vmatprep.subr.mxu0 0.0
    %166 = vmatpush2.msra.mxu0 0.0
    %167 = vmatprep.subr.mxu0 0.0
    %168 = vmatpush2.msra.mxu0 0.0
    %169 = vmatprep.subr.mxu0 0.0
    %170 = vmatpush2.msra.mxu0 0.0
    %171 = vmatprep.subr.mxu0 0.0
    %172 = vmatpush2.msra.mxu0 0.0
    %173 = vmatprep.subr.mxu0 0.0
    %174 = vmatpush2.msra.mxu0 0.0
    %175 = vmatprep.mubr.f32.mxu0 0.0
    %176 = vmatmul.mubr.f32.gmra.mxu0 %v87
    %v177 = vpop.f32.mrf.mxu0
    %v178 = vadd.f32 %v109, %v177
    %v179 = vpop.f32.mrf.mxu0
    %180 = vdwg.mxu0
    %v181 = vld [vmem:[%s5] sm:$0x1]
    %v182 = vmul.f32 %v181, -1e+30
    %v184 = vlaneseq
    %v185 = vshrl.u32 %v184, 7
    %v186 = vsub.s32 0, %v185
    %v187 = vrot.slane %v182, %v186
    %v189 = vadd.f32 %v178, %v187
    %190 = vmax.xlane.f32.xlu0 %v189
    %v191 = vpop.xlane.xlu0 %190
    %v192 = vsub.f32 %v189, %v191
    %v193 = vmul.f32 %v192, 1.442695
    %v194 = vpow.pop %v193
    %195 = vadd.xlane.f32.xlu0 %v194
    %v196 = vpop.xlane.xlu0 %195
    %v197 = vrcp.pop %v196
    %v198 = vmul.f32 %v194, %v197
    %vm199 = vcmp.gt.f32.partialorder %v181, 0.0
    %v200 = vsel %vm199, 1, 0
    %v201 = vlaneseq
    %v202 = vshrl.u32 %v201, 7
    %v203 = vsub.s32 0, %v202
    %v204 = vrot.slane %v200, %v203
    %vm205 = vcmp.eq.s32.totalorder %v204, 1
    %v206 = vsel %vm205, %v178, %v198
    %207 = vst [vmem:[%s6] sm:$0xff] %v206
    // Predicated region
    $region30: #{policy_forward.1} parent=1 // pred_check
      _
    $region31: #{policy_forward.1} parent=1 // pred_check_branch
      %209 = sbr.rel (0) target = $region33
    $region32: #{policy_forward.1} parent=1 // pred_region
      _
    $region33: #{policy_forward.1} parent=1 // pred_fallthru
      _
    // Predicated region
    $region34: #{policy_forward.1} parent=1 // pred_check
      _
    $region35: #{policy_forward.1} parent=1 // pred_check_branch
      %211 = sbr.rel (0) target = $region37
    $region36: #{policy_forward.1} parent=1 // pred_region
      _
    $region37: #{policy_forward.1} parent=1 // pred_fallthru
      _
    %212 = vsyncpa [#allocation3], 1

</llo_original>
